<compile_context>
chip_gen: v5e
topology: v5e:2x2
jax: 0.10.0
libtpu: 0.0.40
codegen_flags: <defaults>
</compile_context>

<pallas_src>
import math

import jax
import jax.numpy as jnp
from jax.experimental import pallas as pl
from jax.experimental.pallas import tpu as pltpu

_LANE = 128
# ~4 MiB per streamed buffer tile -> ~16-17 MiB double-buffered working set:
# on the ~85%+ HBM-roofline plateau for v6e/v7x, still modest for v5e.
_TILE_BYTE_BUDGET = 4 << 20


def _sublane_unit(dtype):
    # Native packed-sublane height: f32 -> 8, bf16/f16 -> 16, int8/fp8 -> 32.
    return {4: 8, 2: 16, 1: 32}.get(jnp.dtype(dtype).itemsize, 8)


def _largest_divisor_multiple(dim, unit, cap):
    """Largest t <= cap with t % unit == 0 and dim % t == 0 (0 if none)."""
    t = (min(dim, cap) // unit) * unit
    while t >= unit and dim % t:
        t -= unit
    return t


def _hadamard_kernel(x_ref, w_ref, o_ref):
    # x_ref: (TB, TN), w_ref: (1, TN) -> broadcast multiply over the sublane
    # (batch) dim.  Pure VPU filler under a DMA-bound stream; do NOT
    # pre-broadcast weights in the wrapper (extra un-hidden HBM pass).
    o_ref[...] = x_ref[...] * w_ref[...]


def hadamard_product(x, weights, *, byte_budget=_TILE_BYTE_BUDGET):
    """out = x * weights, with weights.shape == x.shape[1:] (broadcast over batch)."""
    assert weights.shape == x.shape[1:], (x.shape, weights.shape)
    orig_shape = x.shape
    B = x.shape[0]
    N = math.prod(x.shape[1:])

    x2 = x.reshape(B, N)
    w2 = weights.reshape(1, N)

    itemsize = jnp.dtype(x.dtype).itemsize
    sublane = _sublane_unit(x.dtype)

    # ---- Feature (lane) tile: pick first, as large as the budget allows while
    # leaving room for at least one native sublane group of batch rows.
    if N % _LANE == 0:
        tn_cap = max(_LANE, byte_budget // (sublane * itemsize))
        TN = _largest_divisor_multiple(N, _LANE, min(N, tn_cap)) or N
    else:
        # Full-extent last dim: legal (block dim == array dim), avoids the
        # pad + slice HBM round trips entirely.
        # TODO(synk): split a 128-aligned body + tail call if N is ever both
        # huge and non-128-aligned; not needed for CNN-style C*H*W features.
        TN = N

    # ---- Batch (sublane) tile: whatever of the byte budget is left.
    tb_cap = max(1, byte_budget // (TN * itemsize))
    if B % sublane == 0:
        TB = _largest_divisor_multiple(B, sublane, min(B, max(sublane, tb_cap)))
    elif B % 8 == 0:
        # 8-aligned but not a multiple of the packed-sublane height.
        TB = _largest_divisor_multiple(B, 8, min(B, max(8, tb_cap)))
    else:
        # Full-extent batch block: legal for any B, no pad copy needed.
        TB = B

    feat_tiles = N // TN
    batch_tiles = B // TB

    # v7x has 2 TensorCores: give Mosaic >=2 parallel tiles for large arrays
    # that would otherwise be a single tile (no effect on v5e/v6e, 1 TC).
    if (feat_tiles * batch_tiles == 1 and B * N * itemsize >= (2 << 20)
            and N % _LANE == 0):
        tn_split = _largest_divisor_multiple(N, _LANE, N // 2)
        if tn_split:
            TN = tn_split
            feat_tiles = N // TN

    grid = (feat_tiles, batch_tiles)  # feature tiles OUTER, batch tiles INNER

    # Explicit scoped-VMEM limit from the real working set (double-buffered
    # x + out tiles + the resident weight tile) plus headroom; capped well
    # below v7x's 64 MiB physical VMEM, and above v5e's 16 MiB default.
    tb_pad = -(-TB // sublane) * sublane
    ws_bytes = 2 * (2 * tb_pad * TN + sublane * TN) * itemsize
    vmem_limit = int(min(max(ws_bytes + (8 << 20), 16 << 20), 40 << 20))

    cost = pl.CostEstimate(
        flops=B * N,
        transcendentals=0,
        bytes_accessed=(2 * B * N + N) * itemsize,
    )

    out = pl.pallas_call(
        _hadamard_kernel,
        out_shape=jax.ShapeDtypeStruct((B, N), x.dtype),
        grid_spec=pltpu.PrefetchScalarGridSpec(
            num_scalar_prefetch=0,
            grid=grid,
            in_specs=[
                # Streaming input: default double-buffering is enough for a
                # pure HBM-bandwidth-bound elementwise op.
                pl.BlockSpec((TB, TN), lambda n, b: (b, n)),
                # Weight block index depends only on the outer feature axis,
                # so the tile stays resident in VMEM across the inner batch
                # loop (one HBM fetch per feature tile, not per batch tile).
                pl.BlockSpec((1, TN), lambda n, b: (0, n)),
            ],
            out_specs=pl.BlockSpec((TB, TN), lambda n, b: (b, n)),
        ),
        compiler_params=pltpu.CompilerParams(
            dimension_semantics=("parallel", "parallel"),
            vmem_limit_bytes=vmem_limit,
        ),
        cost_estimate=cost,
    )(x2, w2)

    return out.reshape(orig_shape)


if __name__ == "__main__":
    key = jax.random.PRNGKey(0)
    kx, kw = jax.random.split(key)

    B, C, H, W = 2, 4, 16, 16
    x = jax.random.normal(kx, (B, C, H, W), dtype=jnp.float32)
    # torch.rand -> uniform [0, 1); deterministic synthetic init here.
    weights = jax.random.uniform(kw, (C, H, W), dtype=jnp.float32)

    out = hadamard_product(x, weights)
    out = jax.block_until_ready(out)

    # Reference check (plain JAX broadcasted multiply).
    ref = x * weights[None]
    assert out.shape == (B, C, H, W)
    assert jnp.allclose(out, ref, atol=1e-6, rtol=1e-6)

    print("KERNEL_OK")
</pallas_src>

<mosaic_0001>
module attributes {stable_mosaic.version = 11 : i64} {
  func.func @_hadamard_kernel(%arg0: i32, %arg1: i32, %arg2: memref<2x1024xf32, #tpu.memory_space<vmem>>, %arg3: memref<1x1024xf32, #tpu.memory_space<vmem>>, %arg4: memref<2x1024xf32, #tpu.memory_space<vmem>>) attributes {dimension_semantics = [#tpu.dimension_semantics<parallel>, #tpu.dimension_semantics<parallel>], iteration_bounds = array<i64: 1, 1>, scalar_prefetch = 0 : i64, scratch_operands = 0 : i64, tpu.core_type = #tpu.core_type<tc>, window_params = [{transform_indices = @transform_0, window_bounds = array<i64: 2, 1024>}, {transform_indices = @transform_1, window_bounds = array<i64: 1, 1024>}, {transform_indices = @transform_2, window_bounds = array<i64: 2, 1024>}]} {
    %c0 = arith.constant 0 : index
    %c0_0 = arith.constant 0 : index
    %0 = vector.load %arg2[%c0, %c0_0] : memref<2x1024xf32, #tpu.memory_space<vmem>>, vector<2x1024xf32>
    %c0_1 = arith.constant 0 : index
    %c0_2 = arith.constant 0 : index
    %1 = vector.load %arg3[%c0_1, %c0_2] : memref<1x1024xf32, #tpu.memory_space<vmem>>, vector<1x1024xf32>
    %2 = vector.broadcast %1 : vector<1x1024xf32> to vector<2x1024xf32>
    %3 = arith.mulf %0, %2 : vector<2x1024xf32>
    %c0_3 = arith.constant 0 : index
    %c0_4 = arith.constant 0 : index
    %4 = vector.load %arg4[%c0_3, %c0_4] : memref<2x1024xf32, #tpu.memory_space<vmem>>, vector<2x1024xf32>
    tpu.vector_store %arg4[%c0_3, %c0_4], %3 {strides = array<i32>} : memref<2x1024xf32, #tpu.memory_space<vmem>>, vector<2x1024xf32>,
    return
  }
  func.func @transform_0(%arg0: i32, %arg1: i32) -> (i32, i32) {
    %c0_i32 = arith.constant 0 : i32
    return %arg1, %arg0 : i32, i32
  }
  func.func @transform_1(%arg0: i32, %arg1: i32) -> (i32, i32) {
    %c0_i32 = arith.constant 0 : i32
    %c0_i32_0 = arith.constant 0 : i32
    return %c0_i32, %arg0 : i32, i32
  }
  func.func @transform_2(%arg0: i32, %arg1: i32) -> (i32, i32) {
    %c0_i32 = arith.constant 0 : i32
    return %arg1, %arg0 : i32, i32
  }
}

</mosaic_0001>

<llo_original>
// kernel: tpu_custom_call.1
$region0: #{tpu_custom_call.1}
  #allocation0 [shape = 'u32[]', space=smem, size = 0x4, offset = 0x4, fixed_abs, tag = 'smem constant byte address 0x4 - core index']
  #allocation1 [shape = 'u32[72,128]{1,0:T(1,128)}', space=vmem, size = 0x9000, scoped, tag = 'internal scratch']
  %s0 = inlined_call_operand.hbm [shape: f32[2,1024], index: 0, kind: input, shape index: {}]
  %s1 = inlined_call_operand.hbm [shape: f32[1,1024], index: 1, kind: input, shape index: {}]
  %s2 = inlined_call_operand.hbm [shape: f32[2,1024], index: 2, kind: output, shape index: {}]
  %s3 = sld [smem:[#allocation0]]
  $region26: #{tpu_custom_call.1} parent=0
    _
  %s5 = ssub.s32 1, %s3
  %s6 = scalar_select 0, %s5, %s3
  $region1: #{tpu_custom_call.1} parent=0
    #allocation2 [shape = 'u8[8192]{0}', space=vmem, size = 0x2000, scoped, tag = 'input window, operand 0, single buffered']
    #allocation3 [shape = 's32[1]{0}', space=sflag, size = 0x4, scoped, tag = 'scoped memory for tpu_custom_call.1']
    #allocation4 [shape = 's32[1]{0}', space=sflag, size = 0x4, scoped, tag = 'scoped memory for tpu_custom_call.1']
    #allocation5 [shape = 'u8[4096]{0}', space=vmem, size = 0x1000, scoped, tag = 'input window, operand 1, single buffered']
    #allocation6 [shape = 's32[1]{0}', space=sflag, size = 0x4, scoped, tag = 'scoped memory for tpu_custom_call.1']
    #allocation7 [shape = 'u8[8192]{0}', space=vmem, size = 0x2000, scoped, tag = 'output window, operand 0, single buffered']
    %7 = vsyncpa [#allocation3], 0
    %8 = vsyncpa [#allocation6], 0
    %9 = vsyncpa [#allocation4], 0
    // Predicated region
    $region2: #{tpu_custom_call.1} parent=1 // pred_check
      _
    $region3: #{tpu_custom_call.1} parent=1 // pred_check_branch
      %11 = sbr.rel (0) target = $region5
    $region4: #{tpu_custom_call.1} parent=1 // pred_region
      %13 = vsyncadd [#allocation3], 0
      %s15 = sshll.u32 %s0, 4
      %s16 = int_to_ptr.hbm [resolvable:$true] %s15
      %s17 = sshll.u32 [#allocation2], 4
      %s18 = int_to_ptr.vmem [resolvable:$true] %s17
      %20 = dma.hbm_to_vmem [thread:$0]  %s16, 256, %s18, [#allocation3]
    $region5: #{tpu_custom_call.1} parent=1 // pred_fallthru
      _
    // Predicated region
    $region6: #{tpu_custom_call.1} parent=1 // pred_check
      _
    $region7: #{tpu_custom_call.1} parent=1 // pred_check_branch
      %22 = sbr.rel (0) target = $region9
    $region8: #{tpu_custom_call.1} parent=1 // pred_region
      %24 = vsyncadd [#allocation6], 0
      %s26 = sshll.u32 %s1, 4
      %s27 = int_to_ptr.hbm [resolvable:$true] %s26
      %s28 = sshll.u32 [#allocation5], 4
      %s29 = int_to_ptr.vmem [resolvable:$true] %s28
      %31 = dma.hbm_to_vmem [thread:$0]  %s27, 128, %s29, [#allocation6]
    $region9: #{tpu_custom_call.1} parent=1 // pred_fallthru
      _
    // Predicated region
    $region10: #{tpu_custom_call.1} parent=1 // pred_check
      _
    $region11: #{tpu_custom_call.1} parent=1 // pred_check_branch
      %33 = sbr.rel (0) target = $region13
    $region12: #{tpu_custom_call.1} parent=1 // pred_region
      %35 = dma.done [#allocation3], 256
    $region13: #{tpu_custom_call.1} parent=1 // pred_fallthru
      _
    // Predicated region
    $region14: #{tpu_custom_call.1} parent=1 // pred_check
      _
    $region15: #{tpu_custom_call.1} parent=1 // pred_check_branch
      %37 = sbr.rel (0) target = $region17
    $region16: #{tpu_custom_call.1} parent=1 // pred_region
      %39 = dma.done [#allocation6], 128
    $region17: #{tpu_custom_call.1} parent=1 // pred_fallthru
      _
    %v40 = vld [vmem:[#allocation2] sm:$0xff]
    %v41 = vld [vmem:[#allocation2 + $0x8] sm:$0xff]
    %v42 = vld [vmem:[#allocation5] sm:$0xff]
    %v44 = vperm.slane %v42, 0
    %v45 = vperm.slane %v42, 1
    %v46 = vperm.slane %v42, 2
    %v47 = vperm.slane %v42, 3
    %v48 = vperm.slane %v42, 4
    %v49 = vperm.slane %v42, 5
    %v50 = vperm.slane %v42, 6
    %v51 = vperm.slane %v42, 7
    %v52 = vrot.slane %v45, 6
    %v53 = vrot.slane %v46, 4
    %v54 = vrot.slane %v47, 2
    %v55 = vrot.slane %v49, 6
    %v56 = vrot.slane %v50, 4
    %v57 = vrot.slane %v51, 2
    %vm58 = vcmask 1041408
    %v59 = vsel %vm58, %v44, %v52
    %vm60 = vcmask 1045508
    %v61 = vsel %vm60, %v53, %v54
    %vm62 = vcmask 1043456
    %v63 = vsel %vm62, %v59, %v61
    %v64 = vsel %vm58, %v48, %v55
    %v65 = vsel %vm60, %v56, %v57
    %v66 = vsel %vm62, %v64, %v65
    %v69 = vmul.f32 %v40, %v63
    %v70 = vmul.f32 %v41, %v66
    %71 = vst [vmem:[#allocation7] sm:$0xff] %v69
    %72 = vst [vmem:[#allocation7 + $0x8] sm:$0xff] %v70
    // Predicated region
    $region18: #{tpu_custom_call.1} parent=1 // pred_check
      _
    $region19: #{tpu_custom_call.1} parent=1 // pred_check_branch
      %74 = sbr.rel (0) target = $region21
    $region20: #{tpu_custom_call.1} parent=1 // pred_region
      %76 = vsyncadd [#allocation4], 0
      %s78 = sshll.u32 [#allocation7], 4
      %s79 = int_to_ptr.vmem [resolvable:$true] %s78
      %s80 = sshll.u32 %s2, 4
      %s81 = int_to_ptr.hbm [resolvable:$true] %s80
      %83 = dma.vmem_to_hbm [thread:$0]  %s79, 256, %s81, [#allocation4]
    $region21: #{tpu_custom_call.1} parent=1 // pred_fallthru
      _
    // Predicated region
    $region22: #{tpu_custom_call.1} parent=1 // pred_check
      _
    $region23: #{tpu_custom_call.1} parent=1 // pred_check_branch
      %85 = sbr.rel (0) target = $region25
    $region24: #{tpu_custom_call.1} parent=1 // pred_region
      %87 = dma.done [#allocation4], 256
    $region25: #{tpu_custom_call.1} parent=1 // pred_fallthru
      _
    %88 = vsyncpa [#allocation3], 1
    %89 = vsyncpa [#allocation6], 1
    %90 = vsyncpa [#allocation4], 1

</llo_original>
